<compile_context>
chip_gen: v6e
topology: v6e:2x2x1
jax: 0.10.0
libtpu: 0.0.40
codegen_flags: <defaults>
</compile_context>

<pallas_src>
import functools

import jax
import jax.numpy as jnp
from jax import lax
from jax.experimental import pallas as pl
from jax.experimental.pallas import tpu as pltpu


def _round_up(v: int, m: int) -> int:
    return ((v + m - 1) // m) * m


# ---------------------------------------------------------------------------
# Phase 1: segment mean + transformed_global = tanh(mean @ W)
# ---------------------------------------------------------------------------
def _phase1_kernel(batch_ref, x_ref, w_ref, tg_ref, seg_sum_ref, count_ref, *,
                   mm_dtype):
    t = pl.program_id(0)

    @pl.when(t == 0)
    def _():
        seg_sum_ref[...] = jnp.zeros_like(seg_sum_ref)
        count_ref[...] = jnp.zeros_like(count_ref)

    num_graphs = tg_ref.shape[0]
    b = batch_ref[...]                                           # [1, TN] i32
    gid = lax.broadcasted_iota(jnp.int32, (num_graphs, b.shape[1]), 0)
    onehot_t = (b == gid)                                        # [B, TN] bool, lane-dense

    # scatter_sum(x, batch): contract over the node axis on the MXU.
    seg_sum_ref[...] += jnp.dot(onehot_t.astype(mm_dtype),
                                x_ref[...].astype(mm_dtype),
                                preferred_element_type=jnp.float32)
    # per-graph node counts: lane reduce (XLU) -- no degenerate 1-wide matmul.
    count_ref[...] += jnp.sum(onehot_t.astype(jnp.float32), axis=1,
                              keepdims=True)

    @pl.when(t == pl.num_programs(0) - 1)
    def _():
        # scatter_mean clamps count at 1; reciprocal goes to the EUP slot.
        inv = pl.reciprocal(jnp.maximum(count_ref[...], 1.0), approx=True)
        mean = seg_sum_ref[...] * inv                            # [B, F]
        tg_ref[...] = jnp.tanh(jnp.dot(mean, w_ref[...],
                                       preferred_element_type=jnp.float32))


# ---------------------------------------------------------------------------
# Phase 2: coefs = sigmoid(10 * <x_n, tg[batch_n]>) ; out = scatter_sum(coefs*x)
# ---------------------------------------------------------------------------
def _phase2_kernel(batch_ref, x_ref, tg_ref, out_ref, *, mm_dtype):
    t = pl.program_id(0)

    @pl.when(t == 0)
    def _():
        out_ref[...] = jnp.zeros_like(out_ref)

    num_graphs = out_ref.shape[0]
    b = batch_ref[...]                                           # [1, TN] i32
    gid = lax.broadcasted_iota(jnp.int32, (num_graphs, b.shape[1]), 0)
    onehot_t = (b == gid).astype(jnp.float32)                    # [B, TN]

    x = x_ref[...].astype(mm_dtype)                              # [TN, F]
    tg = tg_ref[...].astype(mm_dtype)                            # [B, F]

    # scores[b, n] = <tg[b, :], x[n, :]> : contracts over F (real MXU shape),
    # lane-dense [B, TN] output.  Replaces the old onehot @ tg gather and the
    # [N, F] tg_per_node intermediate.
    scores = lax.dot_general(tg, x, (((1,), (1,)), ((), ())),
                             preferred_element_type=jnp.float32)  # [B, TN]

    # Pick each node's own-graph score (VPU mask + sublane reduce); fold the
    # x10 onto the [1, TN] vector instead of an [N, F] product.
    sel = jnp.sum(onehot_t * scores, axis=0, keepdims=True)       # [1, TN]
    coefs = jax.nn.sigmoid(10.0 * sel)                            # [1, TN]

    # out[b, :] += sum_n onehot[b, n] * coefs[n] * x[n, :]
    wsel = (onehot_t * coefs).astype(mm_dtype)                    # [B, TN]
    out_ref[...] += jnp.dot(wsel, x, preferred_element_type=jnp.float32)


# ---------------------------------------------------------------------------
# Wrapper
# ---------------------------------------------------------------------------
def attention_module_forward(x, batch, weight_matrix, num_graphs, *,
                             tile_n: int = 512, mm_dtype=jnp.float32):
    """x: [N, F] f32, batch: [N] int, weight_matrix: [F, F] f32 -> [B, F] f32.

    mm_dtype=jnp.bfloat16 gives ~2-3x MXU throughput at large N (one-hot is
    exact in bf16, x is not) -- validate tolerance before enabling: the x10
    scale inside the sigmoid amplifies bf16 rounding of x.
    """
    n, f = x.shape
    # Tile / pad N: tile must be a multiple of 128 (lane-major batch block) and
    # of 8 (x sublanes).  Padded nodes carry graph id == num_graphs, so they
    # fall outside every one-hot column and contribute nothing.
    tn = min(tile_n, _round_up(n, 128))
    n_pad = _round_up(n, tn)
    num_tiles = n_pad // tn

    x_p = jnp.pad(x.astype(jnp.float32), ((0, n_pad - n), (0, 0)))
    batch_p = jnp.pad(batch.astype(jnp.int32), (0, n_pad - n),
                      constant_values=num_graphs).reshape(1, n_pad)
    w = weight_matrix.astype(jnp.float32)

    # TODO(synk): on v7x, add a leading size-2 "parallel" grid axis with
    # per-core partial [B, F] outputs summed by a trivial XLA add to use both
    # TensorCores on the N stream.
    compiler_params = pltpu.CompilerParams(
        dimension_semantics=("arbitrary",))

    # Phase 1: seg_sum / count accumulators resident in VMEM scratch across the
    # N-tile grid; tg = tanh(mean @ W) written on the last tile.
    tg = pl.pallas_call(
        functools.partial(_phase1_kernel, mm_dtype=mm_dtype),
        out_shape=jax.ShapeDtypeStruct((num_graphs, f), jnp.float32),
        grid_spec=pltpu.PrefetchScalarGridSpec(
            num_scalar_prefetch=0,
            grid=(num_tiles,),
            in_specs=[
                pl.BlockSpec((1, tn), lambda t: (0, t)),          # batch (lane-major)
                pl.BlockSpec((tn, f), lambda t: (t, 0)),          # x tile
                pl.BlockSpec((f, f), lambda t: (0, 0)),           # W (resident)
            ],
            out_specs=pl.BlockSpec((num_graphs, f), lambda t: (0, 0)),
            scratch_shapes=[pltpu.VMEM((num_graphs, f), jnp.float32),
                            pltpu.VMEM((num_graphs, 1), jnp.float32)],
        ),
        compiler_params=compiler_params,
    )(batch_p, x_p, w)

    # Phase 2: re-stream x in N-tiles, accumulate weighted scatter-sum into a
    # resident [B, F] output block.
    out = pl.pallas_call(
        functools.partial(_phase2_kernel, mm_dtype=mm_dtype),
        out_shape=jax.ShapeDtypeStruct((num_graphs, f), jnp.float32),
        grid_spec=pltpu.PrefetchScalarGridSpec(
            num_scalar_prefetch=0,
            grid=(num_tiles,),
            in_specs=[
                pl.BlockSpec((1, tn), lambda t: (0, t)),          # batch (lane-major)
                pl.BlockSpec((tn, f), lambda t: (t, 0)),          # x tile
                pl.BlockSpec((num_graphs, f), lambda t: (0, 0)),  # tg (resident)
            ],
            out_specs=pl.BlockSpec((num_graphs, f), lambda t: (0, 0)),
        ),
        compiler_params=compiler_params,
    )(batch_p, x_p, tg)

    return out


# ---------------------------------------------------------------------------
# Pure-JAX reference mirroring the PyTorch forward
# ---------------------------------------------------------------------------
def _reference(x, batch, w, num_graphs):
    seg_sum = jax.ops.segment_sum(x, batch, num_segments=num_graphs)
    count = jax.ops.segment_sum(jnp.ones((x.shape[0],)), batch,
                                num_segments=num_graphs)
    count = jnp.maximum(count, 1.0)[:, None]
    mean = seg_sum / count
    tg = jnp.tanh(mean @ w)
    coefs = jax.nn.sigmoid(jnp.sum(x * tg[batch] * 10.0, axis=1))
    weighted = coefs[:, None] * x
    return jax.ops.segment_sum(weighted, batch, num_segments=num_graphs)


if __name__ == "__main__":
    key = jax.random.PRNGKey(0)
    k_x, k_w = jax.random.split(key)

    # filters_3 = 32, N = 10 nodes split across B = 2 graphs
    F3 = 32
    N = 10
    B = 2

    x = jax.random.normal(k_x, (N, F3), dtype=jnp.float32)
    batch = jnp.array([0, 0, 0, 0, 0, 1, 1, 1, 1, 1], dtype=jnp.int32)

    # xavier_uniform_ init for weight_matrix [F3, F3]: U(-a, a), a = sqrt(6/(2*F3))
    a = (6.0 / (F3 + F3)) ** 0.5
    weight_matrix = jax.random.uniform(
        k_w, (F3, F3), dtype=jnp.float32, minval=-a, maxval=a)

    out = attention_module_forward(x, batch, weight_matrix, B)
    out = jax.block_until_ready(out)

    ref = _reference(x, batch, weight_matrix, B)
    assert out.shape == (B, F3)
    # Tolerance covers the EUP approximate reciprocal propagated through the
    # x10-scaled sigmoid; structural errors show up as O(0.1 - 1) deviations.
    assert jnp.allclose(out, ref, atol=1e-2, rtol=1e-2), "mismatch vs reference"

    print("KERNEL_OK")
</pallas_src>

<mosaic_0001>
module attributes {stable_mosaic.version = 11 : i64} {
  func.func @_phase1_kernel(%arg0: i32, %arg1: memref<1x128xi32, #tpu.memory_space<vmem>>, %arg2: memref<128x32xf32, #tpu.memory_space<vmem>>, %arg3: memref<32x32xf32, #tpu.memory_space<vmem>>, %arg4: memref<2x32xf32, #tpu.memory_space<vmem>>, %arg5: memref<2x32xf32, #tpu.memory_space<vmem>>, %arg6: memref<2x1xf32, #tpu.memory_space<vmem>>) attributes {dimension_semantics = [#tpu.dimension_semantics<arbitrary>], iteration_bounds = array<i64: 1>, scalar_prefetch = 0 : i64, scratch_operands = 2 : i64, tpu.core_type = #tpu.core_type<tc>, window_params = [{transform_indices = @transform_0, window_bounds = array<i64: 1, 128>}, {transform_indices = @transform_1, window_bounds = array<i64: 128, 32>}, {pipeline_mode = #tpu.pipeline_mode<synchronous>, transform_indices = @transform_2, window_bounds = array<i64: 32, 32>}, {pipeline_mode = #tpu.pipeline_mode<synchronous>, transform_indices = @transform_3, window_bounds = array<i64: 2, 32>}]} {
    %c0_i32 = arith.constant 0 : i32
    %0 = arith.cmpi eq, %arg0, %c0_i32 : i32
    %1 = arith.extui %0 : i1 to i32
    %c0_i32_0 = arith.constant 0 : i32
    %2 = arith.cmpi ne, %1, %c0_i32_0 : i32
    scf.if %2 {
      %cst_15 = arith.constant 0.000000e+00 : f32
      %24 = vector.broadcast %cst_15 : f32 to vector<2x32xf32>
      %c0_16 = arith.constant 0 : index
      %c0_17 = arith.constant 0 : index
      %25 = vector.load %arg5[%c0_16, %c0_17] : memref<2x32xf32, #tpu.memory_space<vmem>>, vector<2x32xf32>
      tpu.vector_store %arg5[%c0_16, %c0_17], %24 {strides = array<i32>} : memref<2x32xf32, #tpu.memory_space<vmem>>, vector<2x32xf32>,
      %cst_18 = arith.constant 0.000000e+00 : f32
      %26 = vector.broadcast %cst_18 : f32 to vector<2x1xf32>
      %c0_19 = arith.constant 0 : index
      %c0_20 = arith.constant 0 : index
      %27 = vector.load %arg6[%c0_19, %c0_20] : memref<2x1xf32, #tpu.memory_space<vmem>>, vector<2x1xf32>
      tpu.vector_store %arg6[%c0_19, %c0_20], %26 {strides = array<i32>} : memref<2x1xf32, #tpu.memory_space<vmem>>, vector<2x1xf32>,
    } else {
    }
    %c0 = arith.constant 0 : index
    %c0_1 = arith.constant 0 : index
    %3 = vector.load %arg1[%c0, %c0_1] : memref<1x128xi32, #tpu.memory_space<vmem>>, vector<1x128xi32>
    %4 = tpu.iota {dimensions = array<i32: 0>} : vector<2x128xi32>
    %5 = vector.broadcast %3 : vector<1x128xi32> to vector<2x128xi32>
    %6 = arith.cmpi eq, %5, %4 : vector<2x128xi32>
    %c0_2 = arith.constant 0 : index
    %c0_3 = arith.constant 0 : index
    %7 = vector.load %arg5[%c0_2, %c0_3] : memref<2x32xf32, #tpu.memory_space<vmem>>, vector<2x32xf32>
    %8 = arith.extui %6 : vector<2x128xi1> to vector<2x128xi32>
    %9 = arith.sitofp %8 : vector<2x128xi32> to vector<2x128xf32>
    %c0_4 = arith.constant 0 : index
    %c0_5 = arith.constant 0 : index
    %10 = vector.load %arg2[%c0_4, %c0_5] : memref<128x32xf32, #tpu.memory_space<vmem>>, vector<128x32xf32>
    %cst = arith.constant dense<0.000000e+00> : vector<2x32xf32>
    %11 = tpu.matmul %9, %10, %cst {dimension_numbers = #tpu.dot_dimension_numbers<[1], [0], [0], [1], [0, 0, 1, 1], [], []>} : vector<2x128xf32>, vector<128x32xf32>, vector<2x32xf32> -> vector<2x32xf32>
    %12 = arith.addf %7, %11 : vector<2x32xf32>
    %c0_6 = arith.constant 0 : index
    %c0_7 = arith.constant 0 : index
    %13 = vector.load %arg5[%c0_6, %c0_7] : memref<2x32xf32, #tpu.memory_space<vmem>>, vector<2x32xf32>
    tpu.vector_store %arg5[%c0_6, %c0_7], %12 {strides = array<i32>} : memref<2x32xf32, #tpu.memory_space<vmem>>, vector<2x32xf32>,
    %c0_8 = arith.constant 0 : index
    %c0_9 = arith.constant 0 : index
    %14 = vector.load %arg6[%c0_8, %c0_9] : memref<2x1xf32, #tpu.memory_space<vmem>>, vector<2x1xf32>
    %15 = arith.extui %6 : vector<2x128xi1> to vector<2x128xi32>
    %16 = arith.sitofp %15 : vector<2x128xi32> to vector<2x128xf32>
    %cst_10 = arith.constant dense<0.000000e+00> : vector<2xf32>
    %17 = vector.multi_reduction <add>, %16, %cst_10 [1] : vector<2x128xf32> to vector<2xf32>
    %18 = vector.shape_cast %17 : vector<2xf32> to vector<2x1xf32>
    %19 = arith.addf %14, %18 : vector<2x1xf32>
    %c0_11 = arith.constant 0 : index
    %c0_12 = arith.constant 0 : index
    %20 = vector.load %arg6[%c0_11, %c0_12] : memref<2x1xf32, #tpu.memory_space<vmem>>, vector<2x1xf32>
    tpu.vector_store %arg6[%c0_11, %c0_12], %19 {strides = array<i32>} : memref<2x1xf32, #tpu.memory_space<vmem>>, vector<2x1xf32>,
    %c0_i32_13 = arith.constant 0 : i32
    %21 = arith.cmpi eq, %arg0, %c0_i32_13 : i32
    %22 = arith.extui %21 : i1 to i32
    %c0_i32_14 = arith.constant 0 : i32
    %23 = arith.cmpi ne, %22, %c0_i32_14 : i32
    scf.if %23 {
      %c0_15 = arith.constant 0 : index
      %c0_16 = arith.constant 0 : index
      %24 = vector.load %arg6[%c0_15, %c0_16] : memref<2x1xf32, #tpu.memory_space<vmem>>, vector<2x1xf32>
      %cst_17 = arith.constant 1.000000e+00 : f32
      %25 = vector.broadcast %cst_17 : f32 to vector<2x1xf32>
      %26 = arith.maximumf %24, %25 : vector<2x1xf32>
      %27 = tpu.reciprocal %26 {approx = true} : vector<2x1xf32> -> vector<2x1xf32>
      %c0_18 = arith.constant 0 : index
      %c0_19 = arith.constant 0 : index
      %28 = vector.load %arg5[%c0_18, %c0_19] : memref<2x32xf32, #tpu.memory_space<vmem>>, vector<2x32xf32>
      %29 = vector.broadcast %27 : vector<2x1xf32> to vector<2x32xf32>
      %30 = arith.mulf %28, %29 : vector<2x32xf32>
      %c0_20 = arith.constant 0 : index
      %c0_21 = arith.constant 0 : index
      %31 = vector.load %arg3[%c0_20, %c0_21] : memref<32x32xf32, #tpu.memory_space<vmem>>, vector<32x32xf32>
      %cst_22 = arith.constant dense<0.000000e+00> : vector<2x32xf32>
      %32 = tpu.matmul %30, %31, %cst_22 {dimension_numbers = #tpu.dot_dimension_numbers<[1], [0], [0], [1], [0, 0, 1, 1], [], []>} : vector<2x32xf32>, vector<32x32xf32>, vector<2x32xf32> -> vector<2x32xf32>
      %33 = math.tanh %32 : vector<2x32xf32>
      %c0_23 = arith.constant 0 : index
      %c0_24 = arith.constant 0 : index
      %34 = vector.load %arg4[%c0_23, %c0_24] : memref<2x32xf32, #tpu.memory_space<vmem>>, vector<2x32xf32>
      tpu.vector_store %arg4[%c0_23, %c0_24], %33 {strides = array<i32>} : memref<2x32xf32, #tpu.memory_space<vmem>>, vector<2x32xf32>,
    } else {
    }
    return
  }
  func.func @transform_0(%arg0: i32) -> (i32, i32) {
    %c0_i32 = arith.constant 0 : i32
    %c0_i32_0 = arith.constant 0 : i32
    return %c0_i32, %arg0 : i32, i32
  }
  func.func @transform_1(%arg0: i32) -> (i32, i32) {
    %c0_i32 = arith.constant 0 : i32
    %c0_i32_0 = arith.constant 0 : i32
    return %arg0, %c0_i32 : i32, i32
  }
  func.func @transform_2(%arg0: i32) -> (i32, i32) {
    %c0_i32 = arith.constant 0 : i32
    %c0_i32_0 = arith.constant 0 : i32
    %c0_i32_1 = arith.constant 0 : i32
    return %c0_i32, %c0_i32_0 : i32, i32
  }
  func.func @transform_3(%arg0: i32) -> (i32, i32) {
    %c0_i32 = arith.constant 0 : i32
    %c0_i32_0 = arith.constant 0 : i32
    %c0_i32_1 = arith.constant 0 : i32
    return %c0_i32, %c0_i32_0 : i32, i32
  }
}

</mosaic_0001>

<llo_original>
// kernel: tpu_custom_call.1
$region0: #{tpu_custom_call.1}
  #allocation0 [shape = 'u32[]', space=smem, size = 0x4, offset = 0x4, fixed_abs, tag = 'smem constant byte address 0x4 - core index']
  #allocation1 [shape = 'u32[144,128]{1,0:T(1,128)}', space=vmem, size = 0x12000, scoped, tag = 'internal scratch']
  #allocation2 [shape = 'f32[2,32]{1,0:T(2,128)}', space=vmem, size = 0x400, scoped, tag = 'scratch operand']
  #allocation3 [shape = 'f32[2,1]{1,0:T(2,128)}', space=vmem, size = 0x400, scoped, tag = 'scratch operand']
  %s0 = inlined_call_operand.vmem [shape: s32[1,128], index: 0, kind: input, shape index: {}]
  %s1 = inlined_call_operand.vmem [shape: f32[128,32], index: 1, kind: input, shape index: {}]
  %s2 = inlined_call_operand.vmem [shape: f32[32,32], index: 2, kind: input, shape index: {}]
  %s3 = inlined_call_operand.hbm [shape: f32[2,32], index: 3, kind: output, shape index: {}]
  %s4 = sld [smem:[#allocation0]]
  $region30: #{tpu_custom_call.1} parent=0
    _
  %s6 = ssub.s32 1, %s4
  %s7 = scalar_select 0, %s6, %s4
  $region1: #{tpu_custom_call.1} parent=0
    #allocation4 [shape = 'u8[1024]{0}', space=vmem, size = 0x400, scoped, tag = 'output window, operand 0, single buffered']
    #allocation5 [shape = 's32[1]{0}', space=sflag, size = 0x4, scoped, tag = 'scoped memory for tpu_custom_call.1']
    %8 = vsyncpa [#allocation5], 0
    // Predicated region
    $region2: #{tpu_custom_call.1} parent=1 // pred_check
      _
    $region3: #{tpu_custom_call.1} parent=1 // pred_check_branch
      %10 = sbr.rel (0) target = $region5
    $region4: #{tpu_custom_call.1} parent=1 // pred_region
      _
    $region5: #{tpu_custom_call.1} parent=1 // pred_fallthru
      _
    // Predicated region
    $region6: #{tpu_custom_call.1} parent=1 // pred_check
      _
    $region7: #{tpu_custom_call.1} parent=1 // pred_check_branch
      %12 = sbr.rel (0) target = $region9
    $region8: #{tpu_custom_call.1} parent=1 // pred_region
      _
    $region9: #{tpu_custom_call.1} parent=1 // pred_fallthru
      _
    // Predicated region
    $region10: #{tpu_custom_call.1} parent=1 // pred_check
      _
    $region11: #{tpu_custom_call.1} parent=1 // pred_check_branch
      %14 = sbr.rel (0) target = $region13
    $region12: #{tpu_custom_call.1} parent=1 // pred_region
      _
    $region13: #{tpu_custom_call.1} parent=1 // pred_fallthru
      _
    %p15 = scmp.eq.s32.totalorder 0, 0
    // Predicated region
    $region14: #{tpu_custom_call.1} parent=1 // pred_check
      %p16 = pneg %p15
    $region15: #{tpu_custom_call.1} parent=1 // pred_check_branch
      %18 = sbr.rel (%p16) target = $region17
    $region16: #{tpu_custom_call.1} parent=1 // pred_region
      %vm19 = vcmask 254976
      %20 = vst.msk [vmem:[#allocation2] sm:$0x3] %vm19, 0.0
      %vm21 = vcmask 1024
      %22 = vst.msk [vmem:[#allocation3] sm:$0x3] %vm21, 0.0
    $region17: #{tpu_custom_call.1} parent=1 // pred_fallthru
      _
    %v23 = vld [vmem:[%s0] sm:$0x1]
    %v24 = vlaneseq
    %v25 = vshrl.u32 %v24, 7
    %v26 = vlaneseq
    %v27 = vshrl.u32 %v26, 7
    %v28 = vsub.s32 0, %v27
    %v29 = vrot.slane %v23, %v28
    %vm30 = vcmp.eq.s32.totalorder %v29, %v25
    %v31 = vld [vmem:[#allocation2] sm:$0x3]
    %v32 = vsel %vm30, 1, 0
    %v33 = vcvt.s32.f32 %v32
    %v34 = vld [vmem:[%s1] sm:$0xff]
    %v35 = vld [vmem:[%s1 + $0x8] sm:$0xff]
    %v36 = vld [vmem:[%s1 + $0x10] sm:$0xff]
    %v37 = vld [vmem:[%s1 + $0x18] sm:$0xff]
    %v38 = vld [vmem:[%s1 + $0x20] sm:$0xff]
    %v39 = vld [vmem:[%s1 + $0x28] sm:$0xff]
    %v40 = vld [vmem:[%s1 + $0x30] sm:$0xff]
    %v41 = vld [vmem:[%s1 + $0x38] sm:$0xff]
    %v42 = vld [vmem:[%s1 + $0x40] sm:$0xff]
    %v43 = vld [vmem:[%s1 + $0x48] sm:$0xff]
    %v44 = vld [vmem:[%s1 + $0x50] sm:$0xff]
    %v45 = vld [vmem:[%s1 + $0x58] sm:$0xff]
    %v46 = vld [vmem:[%s1 + $0x60] sm:$0xff]
    %v47 = vld [vmem:[%s1 + $0x68] sm:$0xff]
    %v48 = vld [vmem:[%s1 + $0x70] sm:$0xff]
    %v49 = vld [vmem:[%s1 + $0x78] sm:$0xff]
    %50 = vmatprep.subr.mxu0 0.0
    %51 = vmatpush1.msra.mxu0 %v49
    %52 = vmatprep.subr.mxu0 0.0
    %53 = vmatpush1.msra.mxu0 %v48
    %54 = vmatprep.subr.mxu0 0.0
    %55 = vmatpush1.msra.mxu0 %v47
    %56 = vmatprep.subr.mxu0 0.0
    %57 = vmatpush1.msra.mxu0 %v46
    %58 = vmatprep.subr.mxu0 0.0
    %59 = vmatpush1.msra.mxu0 %v45
    %60 = vmatprep.subr.mxu0 0.0
    %61 = vmatpush1.msra.mxu0 %v44
    %62 = vmatprep.subr.mxu0 0.0
    %63 = vmatpush1.msra.mxu0 %v43
    %64 = vmatprep.subr.mxu0 0.0
    %65 = vmatpush1.msra.mxu0 %v42
    %66 = vmatprep.subr.mxu0 0.0
    %67 = vmatpush1.msra.mxu0 %v41
    %68 = vmatprep.subr.mxu0 0.0
    %69 = vmatpush1.msra.mxu0 %v40
    %70 = vmatprep.subr.mxu0 0.0
    %71 = vmatpush1.msra.mxu0 %v39
    %72 = vmatprep.subr.mxu0 0.0
    %73 = vmatpush1.msra.mxu0 %v38
    %74 = vmatprep.subr.mxu0 0.0
    %75 = vmatpush1.msra.mxu0 %v37
    %76 = vmatprep.subr.mxu0 0.0
    %77 = vmatpush1.msra.mxu0 %v36
    %78 = vmatprep.subr.mxu0 0.0
    %79 = vmatpush1.msra.mxu0 %v35
    %80 = vmatprep.subr.mxu0 0.0
    %81 = vmatpush1.msra.mxu0 %v34
    %82 = vmatprep.subr.mxu0 0.0
    %83 = vmatpush2.msra.mxu0 0.0
    %84 = vmatprep.subr.mxu0 0.0
    %85 = vmatpush2.msra.mxu0 0.0
    %86 = vmatprep.subr.mxu0 0.0
    %87 = vmatpush2.msra.mxu0 0.0
    %88 = vmatprep.subr.mxu0 0.0
    %89 = vmatpush2.msra.mxu0 0.0
    %90 = vmatprep.subr.mxu0 0.0
    %91 = vmatpush2.msra.mxu0 0.0
    %92 = vmatprep.subr.mxu0 0.0
    %93 = vmatpush2.msra.mxu0 0.0
    %94 = vmatprep.subr.mxu0 0.0
    %95 = vmatpush2.msra.mxu0 0.0
    %96 = vmatprep.subr.mxu0 0.0
    %97 = vmatpush2.msra.mxu0 0.0
    %98 = vmatprep.subr.mxu0 0.0
    %99 = vmatpush2.msra.mxu0 0.0
    %100 = vmatprep.subr.mxu0 0.0
    %101 = vmatpush2.msra.mxu0 0.0
    %102 = vmatprep.subr.mxu0 0.0
    %103 = vmatpush2.msra.mxu0 0.0
    %104 = vmatprep.subr.mxu0 0.0
    %105 = vmatpush2.msra.mxu0 0.0
    %106 = vmatprep.subr.mxu0 0.0
    %107 = vmatpush2.msra.mxu0 0.0
    %108 = vmatprep.subr.mxu0 0.0
    %109 = vmatpush2.msra.mxu0 0.0
    %110 = vmatprep.subr.mxu0 0.0
    %111 = vmatpush2.msra.mxu0 0.0
    %112 = vmatprep.subr.mxu0 0.0
    %113 = vmatpush2.msra.mxu0 0.0
    %114 = vmatprep.mubr.f32.mxu0 0.0
    %115 = vmatmul.mubr.f32.gmra.mxu0 %v33
    %v116 = vpop.f32.mrf.mxu0
    %v117 = vadd.f32 0.0, %v116
    %v118 = vpop.f32.mrf.mxu0
    %119 = vdwg.mxu0
    %v120 = vadd.f32 %v31, %v117
    %vm121 = vcmask 254976
    %122 = vst.msk [vmem:[#allocation2] sm:$0x3] %vm121, %v120
    %v123 = vld [vmem:[#allocation3] sm:$0x3]
    %vm124 = vcmask 1041408
    %v125 = vsel %vm124, %v33, 0.0
    %126 = vadd.xlane.f32.xlu0 %v125
    %v127 = vpop.xlane.xlu0 %126
    %v128 = vadd.f32 %v123, %v127
    %vm129 = vcmask 1024
    %130 = vst.msk [vmem:[#allocation3] sm:$0x3] %vm129, %v128
    // Predicated region
    $region18: #{tpu_custom_call.1} parent=1 // pred_check
      %p131 = pneg %p15
    $region19: #{tpu_custom_call.1} parent=1 // pred_check_branch
      %133 = sbr.rel (%p131) target = $region21
    $region20: #{tpu_custom_call.1} parent=1 // pred_region
      %v134 = vld [vmem:[#allocation3] sm:$0x3]
      %v135 = vmax.f32 %v134, 1.0
      %v136 = vrcp.pop %v135
      %v137 = vld [vmem:[#allocation2] sm:$0x3]
      %139 = vset.pattern.permute.xlu0 0
      %140 = vperm.xlu0 %139, %v136
      %v141 = vpop.permute.xlu0 %140
      %v143 = vmul.f32 %v137, %v141
      %v144 = vld [vmem:[%s2] sm:$0xff]
      %v145 = vld [vmem:[%s2 + $0x8] sm:$0xff]
      %v146 = vld [vmem:[%s2 + $0x10] sm:$0xff]
      %v147 = vld [vmem:[%s2 + $0x18] sm:$0xff]
      %vm148 = vcmask 261120
      %v150 = vsel %vm148, %v143, 0
      %152 = vmatprep.subr.mxu0 0.0
      %153 = vmatpush1.msra.mxu0 0.0
      %154 = vmatprep.subr.mxu0 0.0
      %155 = vmatpush1.msra.mxu0 0.0
      %156 = vmatprep.subr.mxu0 0.0
      %157 = vmatpush1.msra.mxu0 0.0
      %158 = vmatprep.subr.mxu0 0.0
      %159 = vmatpush1.msra.mxu0 0.0
      %160 = vmatprep.subr.mxu0 0.0
      %161 = vmatpush1.msra.mxu0 0.0
      %162 = vmatprep.subr.mxu0 0.0
      %163 = vmatpush1.msra.mxu0 0.0
      %164 = vmatprep.subr.mxu0 0.0
      %165 = vmatpush1.msra.mxu0 0.0
      %166 = vmatprep.subr.mxu0 0.0
      %167 = vmatpush1.msra.mxu0 0.0
      %168 = vmatprep.subr.mxu0 0.0
      %169 = vmatpush1.msra.mxu0 0.0
      %170 = vmatprep.subr.mxu0 0.0
      %171 = vmatpush1.msra.mxu0 0.0
      %172 = vmatprep.subr.mxu0 0.0
      %173 = vmatpush1.msra.mxu0 0.0
      %174 = vmatprep.subr.mxu0 0.0
      %175 = vmatpush1.msra.mxu0 0.0
      %176 = vmatprep.subr.mxu0 0.0
      %177 = vmatpush1.msra.mxu0 %v147
      %178 = vmatprep.subr.mxu0 0.0
      %179 = vmatpush1.msra.mxu0 %v146
      %180 = vmatprep.subr.mxu0 0.0
      %181 = vmatpush1.msra.mxu0 %v145
      %182 = vmatprep.subr.mxu0 0.0
      %183 = vmatpush1.msra.mxu0 %v144
      %184 = vmatprep.subr.mxu0 0.0
      %185 = vmatpush2.msra.mxu0 0.0
      %186 = vmatprep.subr.mxu0 0.0
      %187 = vmatpush2.msra.mxu0 0.0
      %188 = vmatprep.subr.mxu0 0.0
      %189 = vmatpush2.msra.mxu0 0.0
      %190 = vmatprep.subr.mxu0 0.0
      %191 = vmatpush2.msra.mxu0 0.0
      %192 = vmatprep.subr.mxu0 0.0
      %193 = vmatpush2.msra.mxu0 0.0
      %194 = vmatprep.subr.mxu0 0.0
      %195 = vmatpush2.msra.mxu0 0.0
      %196 = vmatprep.subr.mxu0 0.0
      %197 = vmatpush2.msra.mxu0 0.0
      %198 = vmatprep.subr.mxu0 0.0
      %199 = vmatpush2.msra.mxu0 0.0
      %200 = vmatprep.subr.mxu0 0.0
      %201 = vmatpush2.msra.mxu0 0.0
      %202 = vmatprep.subr.mxu0 0.0
      %203 = vmatpush2.msra.mxu0 0.0
      %204 = vmatprep.subr.mxu0 0.0
      %205 = vmatpush2.msra.mxu0 0.0
      %206 = vmatprep.subr.mxu0 0.0
      %207 = vmatpush2.msra.mxu0 0.0
      %208 = vmatprep.subr.mxu0 0.0
      %209 = vmatpush2.msra.mxu0 0.0
      %210 = vmatprep.subr.mxu0 0.0
      %211 = vmatpush2.msra.mxu0 0.0
      %212 = vmatprep.subr.mxu0 0.0
      %213 = vmatpush2.msra.mxu0 0.0
      %214 = vmatprep.subr.mxu0 0.0
      %215 = vmatpush2.msra.mxu0 0.0
      %216 = vmatprep.mubr.f32.mxu0 0.0
      %217 = vmatmul.mubr.f32.gmra.mxu0 %v150
      %v218 = vpop.f32.mrf.mxu0
      %v219 = vadd.f32 0.0, %v218
      %v220 = vpop.f32.mrf.mxu0
      %221 = vdwg.mxu0
      %v222 = vtanh.pop %v219
      %223 = vst.msk [vmem:[#allocation4] sm:$0x3] %vm121, %v222
    $region21: #{tpu_custom_call.1} parent=1 // pred_fallthru
      _
    // Predicated region
    $region22: #{tpu_custom_call.1} parent=1 // pred_check
      _
    $region23: #{tpu_custom_call.1} parent=1 // pred_check_branch
      %225 = sbr.rel (0) target = $region25
    $region24: #{tpu_custom_call.1} parent=1 // pred_region
      %s227 = ssub.s32 32, 32
      %228 = vsyncadd [#allocation5], %s227
      %s230 = sshll.u32 [#allocation4], 4
      %s231 = int_to_ptr.vmem [resolvable:$true] %s230
      %233 = dma.vmem_to_hbm [thread:$0]  %s231, 32, %s3, [#allocation5]
    $region25: #{tpu_custom_call.1} parent=1 // pred_fallthru
      _
    // Predicated region
    $region26: #{tpu_custom_call.1} parent=1 // pred_check
      _
    $region27: #{tpu_custom_call.1} parent=1 // pred_check_branch
      %235 = sbr.rel (0) target = $region29
    $region28: #{tpu_custom_call.1} parent=1 // pred_region
      %236 = dma.done [#allocation5], 32
    $region29: #{tpu_custom_call.1} parent=1 // pred_fallthru
      _
    %237 = vsyncpa [#allocation5], 1

</llo_original>
